<compile_context>
chip_gen: v5e
topology: v5e:2x2
jax: 0.10.0
libtpu: 0.0.40
codegen_flags: <defaults>
</compile_context>

<pallas_src>
import functools

import jax
import jax.numpy as jnp
from jax.experimental import pallas as pl
from jax.experimental.pallas import tpu as pltpu

HIDDEN_DIMS = [256, 128, 64]
BN_EPS = 1e-5


def _round_up(n, m):
    return ((n + m - 1) // m) * m


def _choose_tile_b(batch, requested):
    """Sublane-aligned batch tile; keep >= 2 grid steps when the batch allows
    (lets the 'parallel' grid axis shard across the two TensorCores on v7x)."""
    t = max(8, min(requested, _round_up(batch, 8)))
    t = _round_up(t, 8)
    while t > 128 and -(-batch // t) < 2:
        t = max(128, _round_up(t // 2, 8))
    return t


def _mlp_kernel(x_ref,
                w1_ref, b1_ref,
                w2_ref, b2_ref,
                w3_ref, b3_ref,
                w4_ref, b4_ref,
                o_ref):
    """Fused MLP forward for one batch tile. All parameters resident in VMEM."""
    h = x_ref[...]                                            # (tile_b, F) bf16

    # Hidden layer 1: Linear (BN folded in) -> ReLU   (Dropout = identity in eval)
    h = jnp.dot(h, w1_ref[...], preferred_element_type=jnp.float32) + b1_ref[...]
    h = jnp.maximum(h, 0.0)

    # Hidden layer 2
    h = jnp.dot(h.astype(jnp.bfloat16), w2_ref[...],
                preferred_element_type=jnp.float32) + b2_ref[...]
    h = jnp.maximum(h, 0.0)

    # Hidden layer 3
    h = jnp.dot(h.astype(jnp.bfloat16), w3_ref[...],
                preferred_element_type=jnp.float32) + b3_ref[...]
    h = jnp.maximum(h, 0.0)

    # Output Linear(64, 1): VPU multiply + lane reduction (skip the N=1 MXU pass)
    o_ref[...] = jnp.sum(h * w4_ref[...], axis=-1, keepdims=True) + b4_ref[...]


def init_params(key, input_dim, hidden_dims=HIDDEN_DIMS):
    """Mirror the PyTorch __init__: kaiming_normal_(fan_in, relu) weights
    (std = sqrt(2/fan_in)), zero bias, BatchNorm1d defaults
    (gamma=1, beta=0, running_mean=0, running_var=1, eps=1e-5)."""
    keys = jax.random.split(key, len(hidden_dims) + 1)
    hidden = []
    prev = input_dim
    for i, hdim in enumerate(hidden_dims):
        std = (2.0 / prev) ** 0.5
        w = std * jax.random.normal(keys[i], (prev, hdim), jnp.float32)  # (in, out) = W_pt.T
        b = jnp.zeros((hdim,), jnp.float32)
        gamma = jnp.ones((hdim,), jnp.float32)
        beta = jnp.zeros((hdim,), jnp.float32)
        r_mean = jnp.zeros((hdim,), jnp.float32)
        r_var = jnp.ones((hdim,), jnp.float32)
        hidden.append((w, b, gamma, beta, r_mean, r_var))
        prev = hdim
    std = (2.0 / prev) ** 0.5
    w_out = std * jax.random.normal(keys[-1], (prev, 1), jnp.float32)
    b_out = jnp.zeros((1,), jnp.float32)
    return hidden, (w_out, b_out)


def fold_params(hidden_raw, out_raw):
    """Fold eval-mode BatchNorm into each Linear and cast MXU weights to bf16."""
    packed = []
    for (w, b, gamma, beta, r_mean, r_var) in hidden_raw:
        inv = gamma / jnp.sqrt(r_var + BN_EPS)
        w_f = (w * inv[None, :]).astype(jnp.bfloat16)             # (in, out)
        b_f = ((b - r_mean) * inv + beta).reshape(1, -1).astype(jnp.float32)
        packed += [w_f, b_f]
    w_out, b_out = out_raw
    packed += [w_out.reshape(1, -1).astype(jnp.float32),          # (1, prev) row for VPU path
               b_out.reshape(1, 1).astype(jnp.float32)]
    return tuple(packed)


@functools.partial(jax.jit, static_argnames=("tile_b",))
def improved_prediction_model(x, params, *, tile_b=512):
    """Pallas forward pass. x: (B, input_dim); params = fold_params(...)."""
    w1, b1, w2, b2, w3, b3, w4, b4 = params
    B, F = x.shape

    tb = _choose_tile_b(B, tile_b)
    B_pad = _round_up(B, tb)

    x = x.astype(jnp.bfloat16)
    if B_pad != B:
        x = jnp.pad(x, ((0, B_pad - B), (0, 0)))

    def const_spec(arr):
        # Whole (small) parameter resident in VMEM; same block index every grid
        # step, so Pallas does not re-DMA it.
        return pl.BlockSpec(arr.shape, lambda i: (0,) * arr.ndim)

    in_specs = [pl.BlockSpec((tb, F), lambda i: (i, 0))]
    in_specs += [const_spec(p) for p in (w1, b1, w2, b2, w3, b3, w4, b4)]

    out = pl.pallas_call(
        _mlp_kernel,
        out_shape=jax.ShapeDtypeStruct((B_pad, 1), jnp.float32),
        grid_spec=pltpu.PrefetchScalarGridSpec(
            num_scalar_prefetch=0,
            grid=(B_pad // tb,),
            in_specs=in_specs,
            out_specs=pl.BlockSpec((tb, 1), lambda i: (i, 0)),
        ),
        compiler_params=pltpu.CompilerParams(
            dimension_semantics=("parallel",),
        ),
    )(x, w1, b1, w2, b2, w3, b3, w4, b4)

    return out[:B]


def reference_forward(x, params):
    """Pure-JAX reference mirroring the kernel's bf16-weight / f32-accumulate math."""
    w1, b1, w2, b2, w3, b3, w4, b4 = params
    h = x
    for w, b in ((w1, b1), (w2, b2), (w3, b3)):
        h = jnp.dot(h.astype(jnp.bfloat16), w, preferred_element_type=jnp.float32) + b
        h = jnp.maximum(h, 0.0)
    return jnp.sum(h * w4, axis=-1, keepdims=True) + b4


if __name__ == "__main__":
    key = jax.random.PRNGKey(0)
    k_param, k_x = jax.random.split(key)

    B, INPUT_DIM = 16, 32  # small demo shapes
    hidden_raw, out_raw = init_params(k_param, INPUT_DIM)
    params = fold_params(hidden_raw, out_raw)

    x = jax.random.normal(k_x, (B, INPUT_DIM), jnp.float32)

    y = improved_prediction_model(x, params)
    y = jax.block_until_ready(y)

    y_ref = reference_forward(x, params)
    assert y.shape == (B, 1)
    assert jnp.allclose(y, y_ref, atol=1e-2, rtol=1e-2), (
        "mismatch vs JAX reference: max abs err = "
        + str(float(jnp.max(jnp.abs(y - y_ref)))))

    print("KERNEL_OK")
</pallas_src>

<mosaic_0001>
module attributes {stable_mosaic.version = 11 : i64} {
  func.func @_mlp_kernel(%arg0: i32, %arg1: memref<16x32xbf16, #tpu.memory_space<vmem>>, %arg2: memref<32x256xbf16, #tpu.memory_space<vmem>>, %arg3: memref<1x256xf32, #tpu.memory_space<vmem>>, %arg4: memref<256x128xbf16, #tpu.memory_space<vmem>>, %arg5: memref<1x128xf32, #tpu.memory_space<vmem>>, %arg6: memref<128x64xbf16, #tpu.memory_space<vmem>>, %arg7: memref<1x64xf32, #tpu.memory_space<vmem>>, %arg8: memref<1x64xf32, #tpu.memory_space<vmem>>, %arg9: memref<1x1xf32, #tpu.memory_space<vmem>>, %arg10: memref<16x1xf32, #tpu.memory_space<vmem>>) attributes {dimension_semantics = [#tpu.dimension_semantics<parallel>], iteration_bounds = array<i64: 1>, scalar_prefetch = 0 : i64, scratch_operands = 0 : i64, tpu.core_type = #tpu.core_type<tc>, window_params = [{transform_indices = @transform_0, window_bounds = array<i64: 16, 32>}, {pipeline_mode = #tpu.pipeline_mode<synchronous>, transform_indices = @transform_1, window_bounds = array<i64: 32, 256>}, {pipeline_mode = #tpu.pipeline_mode<synchronous>, transform_indices = @transform_2, window_bounds = array<i64: 1, 256>}, {pipeline_mode = #tpu.pipeline_mode<synchronous>, transform_indices = @transform_3, window_bounds = array<i64: 256, 128>}, {pipeline_mode = #tpu.pipeline_mode<synchronous>, transform_indices = @transform_4, window_bounds = array<i64: 1, 128>}, {pipeline_mode = #tpu.pipeline_mode<synchronous>, transform_indices = @transform_5, window_bounds = array<i64: 128, 64>}, {pipeline_mode = #tpu.pipeline_mode<synchronous>, transform_indices = @transform_6, window_bounds = array<i64: 1, 64>}, {pipeline_mode = #tpu.pipeline_mode<synchronous>, transform_indices = @transform_7, window_bounds = array<i64: 1, 64>}, {pipeline_mode = #tpu.pipeline_mode<synchronous>, transform_indices = @transform_8, window_bounds = array<i64: 1, 1>}, {transform_indices = @transform_9, window_bounds = array<i64: 16, 1>}]} {
    %c0 = arith.constant 0 : index
    %c0_0 = arith.constant 0 : index
    %0 = vector.load %arg1[%c0, %c0_0] : memref<16x32xbf16, #tpu.memory_space<vmem>>, vector<16x32xbf16>
    %c0_1 = arith.constant 0 : index
    %c0_2 = arith.constant 0 : index
    %1 = vector.load %arg2[%c0_1, %c0_2] : memref<32x256xbf16, #tpu.memory_space<vmem>>, vector<32x256xbf16>
    %cst = arith.constant dense<0.000000e+00> : vector<16x256xf32>
    %2 = tpu.matmul %0, %1, %cst {dimension_numbers = #tpu.dot_dimension_numbers<[1], [0], [0], [1], [0, 0, 1, 1], [], []>} : vector<16x32xbf16>, vector<32x256xbf16>, vector<16x256xf32> -> vector<16x256xf32>
    %c0_3 = arith.constant 0 : index
    %c0_4 = arith.constant 0 : index
    %3 = vector.load %arg3[%c0_3, %c0_4] : memref<1x256xf32, #tpu.memory_space<vmem>>, vector<1x256xf32>
    %4 = vector.broadcast %3 : vector<1x256xf32> to vector<16x256xf32>
    %5 = arith.addf %2, %4 : vector<16x256xf32>
    %cst_5 = arith.constant 0.000000e+00 : f32
    %6 = vector.broadcast %cst_5 : f32 to vector<16x256xf32>
    %7 = arith.maximumf %5, %6 : vector<16x256xf32>
    %8 = arith.truncf %7 : vector<16x256xf32> to vector<16x256xbf16>
    %c0_6 = arith.constant 0 : index
    %c0_7 = arith.constant 0 : index
    %9 = vector.load %arg4[%c0_6, %c0_7] : memref<256x128xbf16, #tpu.memory_space<vmem>>, vector<256x128xbf16>
    %cst_8 = arith.constant dense<0.000000e+00> : vector<16x128xf32>
    %10 = tpu.matmul %8, %9, %cst_8 {dimension_numbers = #tpu.dot_dimension_numbers<[1], [0], [0], [1], [0, 0, 1, 1], [], []>} : vector<16x256xbf16>, vector<256x128xbf16>, vector<16x128xf32> -> vector<16x128xf32>
    %c0_9 = arith.constant 0 : index
    %c0_10 = arith.constant 0 : index
    %11 = vector.load %arg5[%c0_9, %c0_10] : memref<1x128xf32, #tpu.memory_space<vmem>>, vector<1x128xf32>
    %12 = vector.broadcast %11 : vector<1x128xf32> to vector<16x128xf32>
    %13 = arith.addf %10, %12 : vector<16x128xf32>
    %cst_11 = arith.constant 0.000000e+00 : f32
    %14 = vector.broadcast %cst_11 : f32 to vector<16x128xf32>
    %15 = arith.maximumf %13, %14 : vector<16x128xf32>
    %16 = arith.truncf %15 : vector<16x128xf32> to vector<16x128xbf16>
    %c0_12 = arith.constant 0 : index
    %c0_13 = arith.constant 0 : index
    %17 = vector.load %arg6[%c0_12, %c0_13] : memref<128x64xbf16, #tpu.memory_space<vmem>>, vector<128x64xbf16>
    %cst_14 = arith.constant dense<0.000000e+00> : vector<16x64xf32>
    %18 = tpu.matmul %16, %17, %cst_14 {dimension_numbers = #tpu.dot_dimension_numbers<[1], [0], [0], [1], [0, 0, 1, 1], [], []>} : vector<16x128xbf16>, vector<128x64xbf16>, vector<16x64xf32> -> vector<16x64xf32>
    %c0_15 = arith.constant 0 : index
    %c0_16 = arith.constant 0 : index
    %19 = vector.load %arg7[%c0_15, %c0_16] : memref<1x64xf32, #tpu.memory_space<vmem>>, vector<1x64xf32>
    %20 = vector.broadcast %19 : vector<1x64xf32> to vector<16x64xf32>
    %21 = arith.addf %18, %20 : vector<16x64xf32>
    %cst_17 = arith.constant 0.000000e+00 : f32
    %22 = vector.broadcast %cst_17 : f32 to vector<16x64xf32>
    %23 = arith.maximumf %21, %22 : vector<16x64xf32>
    %c0_18 = arith.constant 0 : index
    %c0_19 = arith.constant 0 : index
    %24 = vector.load %arg8[%c0_18, %c0_19] : memref<1x64xf32, #tpu.memory_space<vmem>>, vector<1x64xf32>
    %25 = vector.broadcast %24 : vector<1x64xf32> to vector<16x64xf32>
    %26 = arith.mulf %23, %25 : vector<16x64xf32>
    %cst_20 = arith.constant dense<0.000000e+00> : vector<16xf32>
    %27 = vector.multi_reduction <add>, %26, %cst_20 [1] : vector<16x64xf32> to vector<16xf32>
    %28 = vector.shape_cast %27 : vector<16xf32> to vector<16x1xf32>
    %c0_21 = arith.constant 0 : index
    %c0_22 = arith.constant 0 : index
    %29 = vector.load %arg9[%c0_21, %c0_22] : memref<1x1xf32, #tpu.memory_space<vmem>>, vector<1x1xf32>
    %30 = vector.broadcast %29 : vector<1x1xf32> to vector<16x1xf32>
    %31 = arith.addf %28, %30 : vector<16x1xf32>
    %c0_23 = arith.constant 0 : index
    %c0_24 = arith.constant 0 : index
    %32 = vector.load %arg10[%c0_23, %c0_24] : memref<16x1xf32, #tpu.memory_space<vmem>>, vector<16x1xf32>
    tpu.vector_store %arg10[%c0_23, %c0_24], %31 {strides = array<i32>} : memref<16x1xf32, #tpu.memory_space<vmem>>, vector<16x1xf32>,
    return
  }
  func.func @transform_0(%arg0: i32) -> (i32, i32) {
    %c0_i32 = arith.constant 0 : i32
    %c0_i32_0 = arith.constant 0 : i32
    return %arg0, %c0_i32 : i32, i32
  }
  func.func @transform_1(%arg0: i32) -> (i32, i32) {
    %c0_i32 = arith.constant 0 : i32
    %c0_i32_0 = arith.constant 0 : i32
    %c0_i32_1 = arith.constant 0 : i32
    return %c0_i32, %c0_i32_0 : i32, i32
  }
  func.func @transform_2(%arg0: i32) -> (i32, i32) {
    %c0_i32 = arith.constant 0 : i32
    %c0_i32_0 = arith.constant 0 : i32
    %c0_i32_1 = arith.constant 0 : i32
    return %c0_i32, %c0_i32_0 : i32, i32
  }
  func.func @transform_3(%arg0: i32) -> (i32, i32) {
    %c0_i32 = arith.constant 0 : i32
    %c0_i32_0 = arith.constant 0 : i32
    %c0_i32_1 = arith.constant 0 : i32
    return %c0_i32, %c0_i32_0 : i32, i32
  }
  func.func @transform_4(%arg0: i32) -> (i32, i32) {
    %c0_i32 = arith.constant 0 : i32
    %c0_i32_0 = arith.constant 0 : i32
    %c0_i32_1 = arith.constant 0 : i32
    return %c0_i32, %c0_i32_0 : i32, i32
  }
  func.func @transform_5(%arg0: i32) -> (i32, i32) {
    %c0_i32 = arith.constant 0 : i32
    %c0_i32_0 = arith.constant 0 : i32
    %c0_i32_1 = arith.constant 0 : i32
    return %c0_i32, %c0_i32_0 : i32, i32
  }
  func.func @transform_6(%arg0: i32) -> (i32, i32) {
    %c0_i32 = arith.constant 0 : i32
    %c0_i32_0 = arith.constant 0 : i32
    %c0_i32_1 = arith.constant 0 : i32
    return %c0_i32, %c0_i32_0 : i32, i32
  }
  func.func @transform_7(%arg0: i32) -> (i32, i32) {
    %c0_i32 = arith.constant 0 : i32
    %c0_i32_0 = arith.constant 0 : i32
    %c0_i32_1 = arith.constant 0 : i32
    return %c0_i32, %c0_i32_0 : i32, i32
  }
  func.func @transform_8(%arg0: i32) -> (i32, i32) {
    %c0_i32 = arith.constant 0 : i32
    %c0_i32_0 = arith.constant 0 : i32
    %c0_i32_1 = arith.constant 0 : i32
    return %c0_i32, %c0_i32_0 : i32, i32
  }
  func.func @transform_9(%arg0: i32) -> (i32, i32) {
    %c0_i32 = arith.constant 0 : i32
    %c0_i32_0 = arith.constant 0 : i32
    return %arg0, %c0_i32 : i32, i32
  }
}

</mosaic_0001>

<llo_original>
// kernel: improved_prediction_model.1
$region0: #{improved_prediction_model.1}
  #allocation0 [shape = 'u32[]', space=smem, size = 0x4, offset = 0x4, fixed_abs, tag = 'smem constant byte address 0x4 - core index']
  #allocation1 [shape = 'u32[72,128]{1,0:T(1,128)}', space=vmem, size = 0x9000, scoped, tag = 'internal scratch']
  #allocation2 [shape = 'f32[1,1]{1,0:T(1,128)S(1)}', space=vmem, size = 0x200, scoped, tag = 'scoped memory for improved_prediction_model.1']
  %s0 = inlined_call_operand.vmem [shape: bf16[16,32], index: 0, kind: input, shape index: {}]
  %s1 = inlined_call_operand.vmem [shape: bf16[32,256], index: 1, kind: input, shape index: {}]
  %s2 = inlined_call_operand.vmem [shape: f32[1,256], index: 2, kind: input, shape index: {}]
  %s3 = inlined_call_operand.hbm [shape: bf16[256,128], index: 3, kind: input, shape index: {}]
  %s4 = inlined_call_operand.vmem [shape: f32[1,128], index: 4, kind: input, shape index: {}]
  %s5 = inlined_call_operand.vmem [shape: bf16[128,64], index: 5, kind: input, shape index: {}]
  %s6 = inlined_call_operand.vmem [shape: f32[1,64], index: 6, kind: input, shape index: {}]
  %s7 = inlined_call_operand.vmem [shape: f32[1,64], index: 7, kind: input, shape index: {}]
  %s8 = inlined_call_operand.<no memory space> [shape: f32[1,1], index: 8, kind: input, shape index: {}]
  %s9 = inlined_call_operand.vmem [shape: f32[16,1], index: 9, kind: output, shape index: {}]
  %s10 = sld [smem:[#allocation0]]
  $region50: #{improved_prediction_model.1} parent=0
    _
  %s12 = ssub.s32 1, %s10
  %s13 = scalar_select 0, %s12, %s10
  %v14 = vstv %s8
  %15 = vst [vmem:[#allocation2] sm:$0x1] %v14
  $region1: #{improved_prediction_model.1} parent=0
    #allocation3 [shape = 'u8[65536]{0}', space=vmem, size = 0x10000, scoped, tag = 'input window, operand 3, single buffered']
    #allocation4 [shape = 's32[1]{0}', space=sflag, size = 0x4, scoped, tag = 'scoped memory for improved_prediction_model.1']
    %16 = vsyncpa [#allocation4], 0
    // Predicated region
    $region2: #{improved_prediction_model.1} parent=1 // pred_check
      _
    $region3: #{improved_prediction_model.1} parent=1 // pred_check_branch
      %18 = sbr.rel (0) target = $region5
    $region4: #{improved_prediction_model.1} parent=1 // pred_region
      _
    $region5: #{improved_prediction_model.1} parent=1 // pred_fallthru
      _
    // Predicated region
    $region6: #{improved_prediction_model.1} parent=1 // pred_check
      _
    $region7: #{improved_prediction_model.1} parent=1 // pred_check_branch
      %20 = sbr.rel (0) target = $region9
    $region8: #{improved_prediction_model.1} parent=1 // pred_region
      _
    $region9: #{improved_prediction_model.1} parent=1 // pred_fallthru
      _
    // Predicated region
    $region10: #{improved_prediction_model.1} parent=1 // pred_check
      _
    $region11: #{improved_prediction_model.1} parent=1 // pred_check_branch
      %22 = sbr.rel (0) target = $region13
    $region12: #{improved_prediction_model.1} parent=1 // pred_region
      _
    $region13: #{improved_prediction_model.1} parent=1 // pred_fallthru
      _
    // Predicated region
    $region14: #{improved_prediction_model.1} parent=1 // pred_check
      _
    $region15: #{improved_prediction_model.1} parent=1 // pred_check_branch
      %24 = sbr.rel (0) target = $region17
    $region16: #{improved_prediction_model.1} parent=1 // pred_region
      %26 = vsyncadd [#allocation4], 0
      %s27 = sshll.u32 %s3, 4
      %s28 = int_to_ptr.hbm [resolvable:$true] %s27
      %s29 = sshll.u32 [#allocation3], 4
      %s30 = int_to_ptr.vmem [resolvable:$true] %s29
      %35 = dma.hbm_to_vmem [thread:$0]  %s28, 2048, %s30, [#allocation4], 64, 64, 4
    $region17: #{improved_prediction_model.1} parent=1 // pred_fallthru
      _
    // Predicated region
    $region18: #{improved_prediction_model.1} parent=1 // pred_check
      _
    $region19: #{improved_prediction_model.1} parent=1 // pred_check_branch
      %37 = sbr.rel (0) target = $region21
    $region20: #{improved_prediction_model.1} parent=1 // pred_region
      _
    $region21: #{improved_prediction_model.1} parent=1 // pred_fallthru
      _
    // Predicated region
    $region22: #{improved_prediction_model.1} parent=1 // pred_check
      _
    $region23: #{improved_prediction_model.1} parent=1 // pred_check_branch
      %39 = sbr.rel (0) target = $region25
    $region24: #{improved_prediction_model.1} parent=1 // pred_region
      _
    $region25: #{improved_prediction_model.1} parent=1 // pred_fallthru
      _
    // Predicated region
    $region26: #{improved_prediction_model.1} parent=1 // pred_check
      _
    $region27: #{improved_prediction_model.1} parent=1 // pred_check_branch
      %41 = sbr.rel (0) target = $region29
    $region28: #{improved_prediction_model.1} parent=1 // pred_region
      _
    $region29: #{improved_prediction_model.1} parent=1 // pred_fallthru
      _
    // Predicated region
    $region30: #{improved_prediction_model.1} parent=1 // pred_check
      _
    $region31: #{improved_prediction_model.1} parent=1 // pred_check_branch
      %43 = sbr.rel (0) target = $region33
    $region32: #{improved_prediction_model.1} parent=1 // pred_region
      _
    $region33: #{improved_prediction_model.1} parent=1 // pred_fallthru
      _
    // Predicated region
    $region34: #{improved_prediction_model.1} parent=1 // pred_check
      _
    $region35: #{improved_prediction_model.1} parent=1 // pred_check_branch
      %45 = sbr.rel (0) target = $region37
    $region36: #{improved_prediction_model.1} parent=1 // pred_region
      _
    $region37: #{improved_prediction_model.1} parent=1 // pred_fallthru
      _
    // Predicated region
    $region38: #{improved_prediction_model.1} parent=1 // pred_check
      _
    $region39: #{improved_prediction_model.1} parent=1 // pred_check_branch
      %47 = sbr.rel (0) target = $region41
    $region40: #{improved_prediction_model.1} parent=1 // pred_region
      %49 = dma.done [#allocation4], 2048
    $region41: #{improved_prediction_model.1} parent=1 // pred_fallthru
      _
    %v51 = vld [vmem:[%s0] sm:$0xf]
    %v52 = vld [vmem:[%s0 + $0x4] sm:$0xf]
    %v53 = vld [vmem:[%s1] sm:$0xff]
    %v54 = vld [vmem:[%s1 + $0x8] sm:$0xff]
    %v55 = vld [vmem:[%s1 + $0x10] sm:$0xff]
    %v56 = vld [vmem:[%s1 + $0x18] sm:$0xff]
    %v57 = vld [vmem:[%s2] sm:$0x3]
    %v59 = vperm.slane %v57, 0
    %v60 = vperm.slane %v57, 1
    %v65 = vunpack.c.l.b16 %v51
    %v66 = vunpack.c.l.b16 %v52
    %v67 = vpack.c.b16 %v66, %v65
    %v72 = vunpack.c.l.b16 %v53
    %v73 = vunpack.c.h.b16 %v53
    %v74 = vunpack.c.l.b16 %v54
    %v75 = vunpack.c.h.b16 %v54
    %v76 = vunpack.c.l.b16 %v55
    %v77 = vunpack.c.h.b16 %v55
    %v78 = vunpack.c.l.b16 %v56
    %v79 = vunpack.c.h.b16 %v56
    %v80 = vpack.c.b16 %v74, %v72
    %v81 = vpack.c.b16 %v75, %v73
    %v82 = vpack.c.b16 %v78, %v76
    %v83 = vpack.c.b16 %v79, %v77
    %vm88 = vcmask 261120
    %v90 = vsel %vm88, %v67, 0
    %92 = vmatpush.bf16.msra.mxu0 0
    %93 = vmatpush.bf16.msra.mxu0 0
    %94 = vmatpush.bf16.msra.mxu0 0
    %95 = vmatpush.bf16.msra.mxu0 0
    %96 = vmatpush.bf16.msra.mxu0 0
    %97 = vmatpush.bf16.msra.mxu0 0
    %98 = vmatpush.bf16.msra.mxu0 %v82
    %99 = vmatpush.bf16.msra.mxu0 %v80
    %100 = vmatmul.bf16.gmra.mxu0 %v90
    %v101 = vpop.f32.mrf.mxu0
    %v102 = vadd.f32 %v59, %v101
    %v103 = vpop.f32.mrf.mxu0
    %v104 = vadd.f32 %v59, %v103
    %105 = vdwg.mxu0
    %106 = vmatpush.bf16.msra.mxu0 0
    %107 = vmatpush.bf16.msra.mxu0 0
    %108 = vmatpush.bf16.msra.mxu0 0
    %109 = vmatpush.bf16.msra.mxu0 0
    %110 = vmatpush.bf16.msra.mxu0 0
    %111 = vmatpush.bf16.msra.mxu0 0
    %112 = vmatpush.bf16.msra.mxu0 %v83
    %113 = vmatpush.bf16.msra.mxu0 %v81
    %114 = vmatmul.bf16.gmra.mxu0 %v90
    %v115 = vpop.f32.mrf.mxu0
    %v116 = vadd.f32 %v60, %v115
    %v117 = vpop.f32.mrf.mxu0
    %v118 = vadd.f32 %v60, %v117
    %119 = vdwg.mxu0
    %v120 = vmax.f32 %v102, 0.0
    %v121 = vmax.f32 %v116, 0.0
    %v122 = vmax.f32 %v104, 0.0
    %v123 = vmax.f32 %v118, 0.0
    %v124 = vpack.c.bf16 %v122, %v120
    %v125 = vpack.c.bf16 %v123, %v121
    %v126 = vld [vmem:[#allocation3] sm:$0xf]
    %v127 = vld [vmem:[#allocation3 + $0x4] sm:$0xf]
    %v128 = vld [vmem:[#allocation3 + $0x8] sm:$0xf]
    %v129 = vld [vmem:[#allocation3 + $0xc] sm:$0xf]
    %v130 = vld [vmem:[#allocation3 + $0x10] sm:$0xf]
    %v131 = vld [vmem:[#allocation3 + $0x14] sm:$0xf]
    %v132 = vld [vmem:[#allocation3 + $0x18] sm:$0xf]
    %v133 = vld [vmem:[#allocation3 + $0x1c] sm:$0xf]
    %v134 = vld [vmem:[#allocation3 + $0x20] sm:$0xf]
    %v135 = vld [vmem:[#allocation3 + $0x24] sm:$0xf]
    %v136 = vld [vmem:[#allocation3 + $0x28] sm:$0xf]
    %v137 = vld [vmem:[#allocation3 + $0x2c] sm:$0xf]
    %v138 = vld [vmem:[#allocation3 + $0x30] sm:$0xf]
    %v139 = vld [vmem:[#allocation3 + $0x34] sm:$0xf]
    %v140 = vld [vmem:[#allocation3 + $0x38] sm:$0xf]
    %v141 = vld [vmem:[#allocation3 + $0x3c] sm:$0xf]
    %v142 = vld [vmem:[#allocation3 + $0x40] sm:$0xf]
    %v143 = vld [vmem:[#allocation3 + $0x44] sm:$0xf]
    %v144 = vld [vmem:[#allocation3 + $0x48] sm:$0xf]
    %v145 = vld [vmem:[#allocation3 + $0x4c] sm:$0xf]
    %v146 = vld [vmem:[#allocation3 + $0x50] sm:$0xf]
    %v147 = vld [vmem:[#allocation3 + $0x54] sm:$0xf]
    %v148 = vld [vmem:[#allocation3 + $0x58] sm:$0xf]
    %v149 = vld [vmem:[#allocation3 + $0x5c] sm:$0xf]
    %v150 = vld [vmem:[#allocation3 + $0x60] sm:$0xf]
    %v151 = vld [vmem:[#allocation3 + $0x64] sm:$0xf]
    %v152 = vld [vmem:[#allocation3 + $0x68] sm:$0xf]
    %v153 = vld [vmem:[#allocation3 + $0x6c] sm:$0xf]
    %v154 = vld [vmem:[#allocation3 + $0x70] sm:$0xf]
    %v155 = vld [vmem:[#allocation3 + $0x74] sm:$0xf]
    %v156 = vld [vmem:[#allocation3 + $0x78] sm:$0xf]
    %v157 = vld [vmem:[#allocation3 + $0x7c] sm:$0xf]
    %v158 = vld [vmem:[%s4] sm:$0x1]
    %v160 = vperm.slane %v158, 0
    %v194 = vunpack.c.l.b16 %v126
    %v195 = vunpack.c.l.b16 %v127
    %v196 = vunpack.c.l.b16 %v128
    %v197 = vunpack.c.l.b16 %v129
    %v198 = vunpack.c.l.b16 %v130
    %v199 = vunpack.c.l.b16 %v131
    %v200 = vunpack.c.l.b16 %v132
    %v201 = vunpack.c.l.b16 %v133
    %v202 = vunpack.c.l.b16 %v134
    %v203 = vunpack.c.l.b16 %v135
    %v204 = vunpack.c.l.b16 %v136
    %v205 = vunpack.c.l.b16 %v137
    %v206 = vunpack.c.l.b16 %v138
    %v207 = vunpack.c.l.b16 %v139
    %v208 = vunpack.c.l.b16 %v140
    %v209 = vunpack.c.l.b16 %v141
    %v210 = vunpack.c.l.b16 %v142
    %v211 = vunpack.c.l.b16 %v143
    %v212 = vunpack.c.l.b16 %v144
    %v213 = vunpack.c.l.b16 %v145
    %v214 = vunpack.c.l.b16 %v146
    %v215 = vunpack.c.l.b16 %v147
    %v216 = vunpack.c.l.b16 %v148
    %v217 = vunpack.c.l.b16 %v149
    %v218 = vunpack.c.l.b16 %v150
    %v219 = vunpack.c.l.b16 %v151
    %v220 = vunpack.c.l.b16 %v152
    %v221 = vunpack.c.l.b16 %v153
    %v222 = vunpack.c.l.b16 %v154
    %v223 = vunpack.c.l.b16 %v155
    %v224 = vunpack.c.l.b16 %v156
    %v225 = vunpack.c.l.b16 %v157
    %v226 = vpack.c.b16 %v195, %v194
    %v227 = vpack.c.b16 %v197, %v196
    %v228 = vpack.c.b16 %v199, %v198
    %v229 = vpack.c.b16 %v201, %v200
    %v230 = vpack.c.b16 %v203, %v202
    %v231 = vpack.c.b16 %v205, %v204
    %v232 = vpack.c.b16 %v207, %v206
    %v233 = vpack.c.b16 %v209, %v208
    %v234 = vpack.c.b16 %v211, %v210
    %v235 = vpack.c.b16 %v213, %v212
    %v236 = vpack.c.b16 %v215, %v214
    %v237 = vpack.c.b16 %v217, %v216
    %v238 = vpack.c.b16 %v219, %v218
    %v239 = vpack.c.b16 %v221, %v220
    %v240 = vpack.c.b16 %v223, %v222
    %v241 = vpack.c.b16 %v225, %v224
    %258 = vmatpush.bf16.msra.mxu0 %v233
    %259 = vmatpush.bf16.msra.mxu0 %v232
    %260 = vmatpush.bf16.msra.mxu0 %v231
    %261 = vmatpush.bf16.msra.mxu0 %v230
    %262 = vmatpush.bf16.msra.mxu0 %v229
    %263 = vmatpush.bf16.msra.mxu0 %v228
    %264 = vmatpush.bf16.msra.mxu0 %v227
    %265 = vmatpush.bf16.msra.mxu0 %v226
    %266 = vmatmul.bf16.gmra.mxu0 %v124
    %v267 = vpop.f32.mrf.mxu0
    %v268 = vadd.f32 %v160, %v267
    %v269 = vpop.f32.mrf.mxu0
    %v270 = vadd.f32 %v160, %v269
    %271 = vdwg.mxu0
    %272 = vmatpush.bf16.msra.mxu0 %v241
    %273 = vmatpush.bf16.msra.mxu0 %v240
    %274 = vmatpush.bf16.msra.mxu0 %v239
    %275 = vmatpush.bf16.msra.mxu0 %v238
    %276 = vmatpush.bf16.msra.mxu0 %v237
    %277 = vmatpush.bf16.msra.mxu0 %v236
    %278 = vmatpush.bf16.msra.mxu0 %v235
    %279 = vmatpush.bf16.msra.mxu0 %v234
    %280 = vmatmul.bf16.gmra.mxu0 %v125
    %v281 = vpop.f32.mrf.mxu0
    %v282 = vadd.f32 %v268, %v281
    %v283 = vpop.f32.mrf.mxu0
    %v284 = vadd.f32 %v270, %v283
    %285 = vdwg.mxu0
    %v286 = vmax.f32 %v282, 0.0
    %v287 = vmax.f32 %v284, 0.0
    %v288 = vpack.c.bf16 %v287, %v286
    %v289 = vld [vmem:[%s5] sm:$0xf]
    %v290 = vld [vmem:[%s5 + $0x4] sm:$0xf]
    %v291 = vld [vmem:[%s5 + $0x8] sm:$0xf]
    %v292 = vld [vmem:[%s5 + $0xc] sm:$0xf]
    %v293 = vld [vmem:[%s5 + $0x10] sm:$0xf]
    %v294 = vld [vmem:[%s5 + $0x14] sm:$0xf]
    %v295 = vld [vmem:[%s5 + $0x18] sm:$0xf]
    %v296 = vld [vmem:[%s5 + $0x1c] sm:$0xf]
    %v297 = vld [vmem:[%s5 + $0x20] sm:$0xf]
    %v298 = vld [vmem:[%s5 + $0x24] sm:$0xf]
    %v299 = vld [vmem:[%s5 + $0x28] sm:$0xf]
    %v300 = vld [vmem:[%s5 + $0x2c] sm:$0xf]
    %v301 = vld [vmem:[%s5 + $0x30] sm:$0xf]
    %v302 = vld [vmem:[%s5 + $0x34] sm:$0xf]
    %v303 = vld [vmem:[%s5 + $0x38] sm:$0xf]
    %v304 = vld [vmem:[%s5 + $0x3c] sm:$0xf]
    %v305 = vld [vmem:[%s6] sm:$0x1]
    %v307 = vperm.slane %v305, 0
    %v325 = vunpack.c.l.b16 %v289
    %v326 = vunpack.c.l.b16 %v290
    %v327 = vunpack.c.l.b16 %v291
    %v328 = vunpack.c.l.b16 %v292
    %v329 = vunpack.c.l.b16 %v293
    %v330 = vunpack.c.l.b16 %v294
    %v331 = vunpack.c.l.b16 %v295
    %v332 = vunpack.c.l.b16 %v296
    %v333 = vunpack.c.l.b16 %v297
    %v334 = vunpack.c.l.b16 %v298
    %v335 = vunpack.c.l.b16 %v299
    %v336 = vunpack.c.l.b16 %v300
    %v337 = vunpack.c.l.b16 %v301
    %v338 = vunpack.c.l.b16 %v302
    %v339 = vunpack.c.l.b16 %v303
    %v340 = vunpack.c.l.b16 %v304
    %v341 = vpack.c.b16 %v326, %v325
    %v342 = vpack.c.b16 %v328, %v327
    %v343 = vpack.c.b16 %v330, %v329
    %v344 = vpack.c.b16 %v332, %v331
    %v345 = vpack.c.b16 %v334, %v333
    %v346 = vpack.c.b16 %v336, %v335
    %v347 = vpack.c.b16 %v338, %v337
    %v348 = vpack.c.b16 %v340, %v339
    %357 = vmatpush.bf16.msra.mxu0 %v348
    %358 = vmatpush.bf16.msra.mxu0 %v347
    %359 = vmatpush.bf16.msra.mxu0 %v346
    %360 = vmatpush.bf16.msra.mxu0 %v345
    %361 = vmatpush.bf16.msra.mxu0 %v344
    %362 = vmatpush.bf16.msra.mxu0 %v343
    %363 = vmatpush.bf16.msra.mxu0 %v342
    %364 = vmatpush.bf16.msra.mxu0 %v341
    %365 = vmatmul.bf16.gmra.mxu0 %v288
    %v366 = vpop.f32.mrf.mxu0
    %v367 = vadd.f32 %v307, %v366
    %v368 = vpop.f32.mrf.mxu0
    %v369 = vadd.f32 %v307, %v368
    %370 = vdwg.mxu0
    %v371 = vmax.f32 %v367, 0.0
    %v372 = vmax.f32 %v369, 0.0
    %v373 = vld [vmem:[%s7] sm:$0x1]
    %v375 = vperm.slane %v373, 0
    %v377 = vmul.f32 %v371, %v375
    %v378 = vmul.f32 %v372, %v375
    %vm379 = vcmask 523264
    %v380 = vsel %vm379, %v377, 0.0
    %381 = vadd.xlane.f32.xlu0 %v380
    %v382 = vpop.xlane.xlu0 %381
    %v383 = vsel %vm379, %v378, 0.0
    %384 = vadd.xlane.f32.xlu0 %v383
    %v385 = vpop.xlane.xlu0 %384
    %v386 = vld [vmem:[#allocation2] sm:$0x1]
    %v388 = vperm.slane %v386, 0
    %v390 = vadd.f32 %v382, %v388
    %v391 = vadd.f32 %v385, %v388
    %vm392 = vcmask 7168
    %393 = vst.msk [vmem:[%s9] sm:$0xff] %vm392, %v390
    %394 = vst.msk [vmem:[%s9 + $0x8] sm:$0xff] %vm392, %v391
    // Predicated region
    $region42: #{improved_prediction_model.1} parent=1 // pred_check
      _
    $region43: #{improved_prediction_model.1} parent=1 // pred_check_branch
      %396 = sbr.rel (0) target = $region45
    $region44: #{improved_prediction_model.1} parent=1 // pred_region
      _
    $region45: #{improved_prediction_model.1} parent=1 // pred_fallthru
      _
    // Predicated region
    $region46: #{improved_prediction_model.1} parent=1 // pred_check
      _
    $region47: #{improved_prediction_model.1} parent=1 // pred_check_branch
      %398 = sbr.rel (0) target = $region49
    $region48: #{improved_prediction_model.1} parent=1 // pred_region
      _
    $region49: #{improved_prediction_model.1} parent=1 // pred_fallthru
      _
    %399 = vsyncpa [#allocation4], 1

</llo_original>
